<compile_context>
chip_gen: v6e
topology: v6e:2x2x1
jax: 0.10.0
libtpu: 0.0.40
codegen_flags: <defaults>
</compile_context>

<pallas_src>
import functools

import jax
import jax.numpy as jnp
from jax.experimental import pallas as pl
from jax.experimental.pallas import tpu as pltpu


LANES = 128          # TPU lane width
HALF = LANES // 2    # one packed example occupies one 64-lane half


def _round_up(x, m):
    return ((x + m - 1) // m) * m


def _gelu_kernel(v):
    # tanh-form GELU (EUP-friendly), per performance review.  Max deviation
    # from torch.nn.GELU() (exact erf) is ~1e-3 pre-propagation; the __main__
    # self-test checks the end-to-end deviation against an erf reference.
    c = 0.7978845608028654  # sqrt(2/pi)
    return 0.5 * v * (1.0 + jnp.tanh(c * (v + 0.044715 * v * v * v)))


def _gelu_exact(v):
    # exact GELU (erf), same as torch.nn.GELU(approximate='none'); used only
    # in the pure-JAX reference.
    return jax.nn.gelu(v, approximate=False)


def res_backbone_kernel(x_ref, w_ref, b_ref, out_ref, *, num_layers):
    """One batch tile.  x_ref holds two examples per 128-lane row, each half
    already laid out as [0...0 | x | sin(x) | cos(x)] (skip_off leading zeros).
    Weights are block-diagonal per half, so the two examples never mix."""
    x_skip = x_ref[...]                                           # (tb, 128) f32
    h = x_skip
    for i in range(num_layers):
        # padded 128x128 MXU matmul; padded lanes stay exactly zero
        # (zero weight columns, zero bias, GELU(0)=0).
        h = jnp.dot(h, w_ref[i], preferred_element_type=jnp.float32) + b_ref[i]
        h = _gelu_kernel(h)
        # TODO(synk): nn.Dropout omitted (inference/eval semantics: identity).

    # torch.cat((h, x_skip), dim=1) folded into the lane layout: per half,
    # h occupies lanes [0, skip_off), x_skip occupies [skip_off, 64) -> add.
    out_ref[...] = (h + x_skip).astype(out_ref.dtype)


def pack_params(params, input_c, N):
    """Block-diagonal packing: each (in,out) weight is zero-padded and
    duplicated into both 64-lane halves of a (128,128) tile; biases likewise.
    fc_1 keeps its skip_off row offset within each half."""
    skip_off = N - 3 * input_c
    nl = len(params)
    w_all = jnp.zeros((nl, LANES, LANES), jnp.float32)
    b_all = jnp.zeros((nl, 1, LANES), jnp.float32)
    for i, (W, b) in enumerate(params):
        di, do = W.shape
        r0 = skip_off if i == 0 else 0
        assert r0 + di <= HALF and do <= HALF, "layer does not fit a 64-lane half"
        Wf = W.astype(jnp.float32)
        bf = b.astype(jnp.float32)
        for h0 in (0, HALF):  # duplicate into both halves (block diagonal)
            w_all = w_all.at[i, h0 + r0:h0 + r0 + di, h0:h0 + do].set(Wf)
            b_all = b_all.at[i, 0, h0:h0 + do].set(bf)
    return w_all, b_all


def res_backbone_forward(x, params, *, N=64, tile_rows=2048):
    """x: (B, input_c) float32.  params: [(W, b)] * 5 with W as (in, out).
    Returns (B, N) float32."""
    B, input_c = x.shape
    skip_off = N - 3 * input_c
    assert skip_off > 0, "need N > 3*input_c"
    assert N == HALF, "2-examples-per-row packing assumes N == 64"
    nl = len(params)

    w_all, b_all = pack_params(params, input_c, N)

    # sin/cos computed on the narrow (B, input_c) input; ONE fused concat
    # builds each example's 64-lane layout [zeros(skip_off) | x | sin | cos].
    x32 = x.astype(jnp.float32)
    x_half = jnp.concatenate(
        [jnp.zeros((B, skip_off), jnp.float32), x32, jnp.sin(x32), jnp.cos(x32)],
        axis=1)                                                   # (B, 64)

    # Two examples per 128-lane row: example 2r -> lanes [0,64), 2r+1 -> [64,128).
    rows_needed = pl.cdiv(B, 2)
    # Large tiles, but keep >= 2 grid steps when possible (both TensorCores
    # under dimension_semantics=("parallel",)); tiles a multiple of 8 sublanes.
    tile_rows = min(tile_rows, max(8, _round_up(pl.cdiv(rows_needed, 2), 8)))
    rows_p = _round_up(rows_needed, tile_rows)
    Bp = 2 * rows_p
    if Bp != B:
        x_half = jnp.pad(x_half, ((0, Bp - B), (0, 0)))
    x_in = x_half.reshape(rows_p, LANES)                          # (rows_p, 128)

    layer_dims = [(W.shape[0], W.shape[1]) for W, _ in params]
    cost = pl.CostEstimate(
        flops=int(2 * Bp * sum(di * do for di, do in layer_dims)),
        transcendentals=int(Bp * sum(do for _, do in layer_dims)),
        bytes_accessed=int(4 * (2 * rows_p * LANES + nl * LANES * LANES + nl * LANES)),
    )

    kernel = functools.partial(res_backbone_kernel, num_layers=nl)

    out = pl.pallas_call(
        kernel,
        out_shape=jax.ShapeDtypeStruct((rows_p, LANES), jnp.float32),
        grid_spec=pltpu.PrefetchScalarGridSpec(
            num_scalar_prefetch=0,
            grid=(rows_p // tile_rows,),
            in_specs=[
                pl.BlockSpec((tile_rows, LANES), lambda i: (i, 0)),      # packed x_skip
                pl.BlockSpec((nl, LANES, LANES), lambda i: (0, 0, 0)),   # weights (VMEM-resident)
                pl.BlockSpec((nl, 1, LANES), lambda i: (0, 0, 0)),       # biases  (VMEM-resident)
            ],
            out_specs=pl.BlockSpec((tile_rows, LANES), lambda i: (i, 0)),
        ),
        compiler_params=pltpu.CompilerParams(
            dimension_semantics=("parallel",)),
        cost_estimate=cost,
    )(x_in, w_all, b_all)

    # De-interleave the 2-per-row packing: (rows_p, 128) -> (Bp, 64).  Each
    # 64-lane half is exactly one example's N=64 outputs, so there is no lane
    # slicing; only a cheap row slice when the batch is ragged/padded.
    out = out.reshape(Bp, HALF)
    return out[:B] if Bp != B else out


def make_params(key, input_c=10, N=64):
    """Deterministic synthetic parameters (not a checkpoint load)."""
    d_in = 3 * input_c
    dims = [(d_in, N),
            (N, round(N / 2)),
            (round(N / 2), round(N / 4)),
            (round(N / 4), round(N / 2)),
            (round(N / 2), N - d_in)]
    keys = jax.random.split(key, 2 * len(dims))
    params = []
    for li, (di, do) in enumerate(dims):
        W = 0.1 * jax.random.normal(keys[2 * li], (di, do), dtype=jnp.float32)
        b = 0.1 * jax.random.normal(keys[2 * li + 1], (do,), dtype=jnp.float32)
        params.append((W, b))
    return params


def reference_forward(x, params):
    """Pure-JAX reference with the module's exact (eval-mode) semantics:
    exact-erf GELU and high-precision fp32 matmuls."""
    x_skip = jnp.concatenate([x, jnp.sin(x), jnp.cos(x)], axis=-1)
    h = x_skip
    for W, b in params:
        h = _gelu_exact(
            jnp.dot(h, W, precision=jax.lax.Precision.HIGHEST) + b)
    return jnp.concatenate([h, x_skip], axis=-1)


if __name__ == "__main__":
    key = jax.random.PRNGKey(0)
    k_x, k_p = jax.random.split(key)

    input_c, N = 10, 64
    batch = 19  # ragged + odd on purpose: exercises pair packing, padding, 2-step grid

    x = jax.random.normal(k_x, (batch, input_c), dtype=jnp.float32)
    params = make_params(k_p, input_c, N)

    out = res_backbone_forward(x, params, N=N)
    out = jax.block_until_ready(out)

    ref = reference_forward(x, params)
    assert out.shape == (batch, N)
    # Tolerance covers (a) tanh-GELU vs exact-erf GELU (~1e-3) and (b) the
    # MXU's generation-dependent default f32 precision vs the HIGHEST-precision
    # reference; structural/packing bugs would be O(0.1-1) and still caught.
    assert jnp.allclose(out, ref, atol=2e-2, rtol=2e-2), "mismatch vs reference"

    print("KERNEL_OK")
</pallas_src>

<mosaic_0001>
module attributes {stable_mosaic.version = 11 : i64} {
  func.func @res_backbone_kernel(%arg0: i32, %arg1: memref<8x128xf32, #tpu.memory_space<vmem>>, %arg2: memref<5x128x128xf32, #tpu.memory_space<vmem>>, %arg3: memref<5x1x128xf32, #tpu.memory_space<vmem>>, %arg4: memref<8x128xf32, #tpu.memory_space<vmem>>) attributes {dimension_semantics = [#tpu.dimension_semantics<parallel>], iteration_bounds = array<i64: 2>, scalar_prefetch = 0 : i64, scratch_operands = 0 : i64, tpu.core_type = #tpu.core_type<tc>, window_params = [{transform_indices = @transform_0, window_bounds = array<i64: 8, 128>}, {pipeline_mode = #tpu.pipeline_mode<synchronous>, transform_indices = @transform_1, window_bounds = array<i64: 5, 128, 128>}, {pipeline_mode = #tpu.pipeline_mode<synchronous>, transform_indices = @transform_2, window_bounds = array<i64: 5, 1, 128>}, {transform_indices = @transform_3, window_bounds = array<i64: 8, 128>}]} {
    %c0 = arith.constant 0 : index
    %c0_0 = arith.constant 0 : index
    %0 = vector.load %arg1[%c0, %c0_0] : memref<8x128xf32, #tpu.memory_space<vmem>>, vector<8x128xf32>
    %c0_1 = arith.constant 0 : index
    %c0_2 = arith.constant 0 : index
    %c0_3 = arith.constant 0 : index
    %1 = vector.load %arg2[%c0_1, %c0_2, %c0_3] : memref<5x128x128xf32, #tpu.memory_space<vmem>>, vector<1x128x128xf32>
    %2 = vector.shape_cast %1 : vector<1x128x128xf32> to vector<128x128xf32>
    %cst = arith.constant dense<0.000000e+00> : vector<8x128xf32>
    %3 = tpu.matmul %0, %2, %cst {dimension_numbers = #tpu.dot_dimension_numbers<[1], [0], [0], [1], [0, 0, 1, 1], [], []>} : vector<8x128xf32>, vector<128x128xf32>, vector<8x128xf32> -> vector<8x128xf32>
    %c0_4 = arith.constant 0 : index
    %c0_5 = arith.constant 0 : index
    %c0_6 = arith.constant 0 : index
    %4 = vector.load %arg3[%c0_4, %c0_5, %c0_6] : memref<5x1x128xf32, #tpu.memory_space<vmem>>, vector<1x1x128xf32>
    %5 = vector.shape_cast %4 : vector<1x1x128xf32> to vector<1x128xf32>
    %6 = vector.broadcast %5 : vector<1x128xf32> to vector<8x128xf32>
    %7 = arith.addf %3, %6 : vector<8x128xf32>
    %cst_7 = arith.constant 5.000000e-01 : f32
    %8 = vector.broadcast %cst_7 : f32 to vector<8x128xf32>
    %9 = arith.mulf %8, %7 : vector<8x128xf32>
    %cst_8 = arith.constant 4.471500e-02 : f32
    %10 = vector.broadcast %cst_8 : f32 to vector<8x128xf32>
    %11 = arith.mulf %10, %7 : vector<8x128xf32>
    %12 = arith.mulf %11, %7 : vector<8x128xf32>
    %13 = arith.mulf %12, %7 : vector<8x128xf32>
    %14 = arith.addf %7, %13 : vector<8x128xf32>
    %cst_9 = arith.constant 0.797884583 : f32
    %15 = vector.broadcast %cst_9 : f32 to vector<8x128xf32>
    %16 = arith.mulf %15, %14 : vector<8x128xf32>
    %17 = math.tanh %16 : vector<8x128xf32>
    %cst_10 = arith.constant 1.000000e+00 : f32
    %18 = vector.broadcast %cst_10 : f32 to vector<8x128xf32>
    %19 = arith.addf %18, %17 : vector<8x128xf32>
    %20 = arith.mulf %9, %19 : vector<8x128xf32>
    %c1 = arith.constant 1 : index
    %c0_11 = arith.constant 0 : index
    %c0_12 = arith.constant 0 : index
    %21 = vector.load %arg2[%c1, %c0_11, %c0_12] : memref<5x128x128xf32, #tpu.memory_space<vmem>>, vector<1x128x128xf32>
    %22 = vector.shape_cast %21 : vector<1x128x128xf32> to vector<128x128xf32>
    %cst_13 = arith.constant dense<0.000000e+00> : vector<8x128xf32>
    %23 = tpu.matmul %20, %22, %cst_13 {dimension_numbers = #tpu.dot_dimension_numbers<[1], [0], [0], [1], [0, 0, 1, 1], [], []>} : vector<8x128xf32>, vector<128x128xf32>, vector<8x128xf32> -> vector<8x128xf32>
    %c1_14 = arith.constant 1 : index
    %c0_15 = arith.constant 0 : index
    %c0_16 = arith.constant 0 : index
    %24 = vector.load %arg3[%c1_14, %c0_15, %c0_16] : memref<5x1x128xf32, #tpu.memory_space<vmem>>, vector<1x1x128xf32>
    %25 = vector.shape_cast %24 : vector<1x1x128xf32> to vector<1x128xf32>
    %26 = vector.broadcast %25 : vector<1x128xf32> to vector<8x128xf32>
    %27 = arith.addf %23, %26 : vector<8x128xf32>
    %cst_17 = arith.constant 5.000000e-01 : f32
    %28 = vector.broadcast %cst_17 : f32 to vector<8x128xf32>
    %29 = arith.mulf %28, %27 : vector<8x128xf32>
    %cst_18 = arith.constant 4.471500e-02 : f32
    %30 = vector.broadcast %cst_18 : f32 to vector<8x128xf32>
    %31 = arith.mulf %30, %27 : vector<8x128xf32>
    %32 = arith.mulf %31, %27 : vector<8x128xf32>
    %33 = arith.mulf %32, %27 : vector<8x128xf32>
    %34 = arith.addf %27, %33 : vector<8x128xf32>
    %cst_19 = arith.constant 0.797884583 : f32
    %35 = vector.broadcast %cst_19 : f32 to vector<8x128xf32>
    %36 = arith.mulf %35, %34 : vector<8x128xf32>
    %37 = math.tanh %36 : vector<8x128xf32>
    %cst_20 = arith.constant 1.000000e+00 : f32
    %38 = vector.broadcast %cst_20 : f32 to vector<8x128xf32>
    %39 = arith.addf %38, %37 : vector<8x128xf32>
    %40 = arith.mulf %29, %39 : vector<8x128xf32>
    %c2 = arith.constant 2 : index
    %c0_21 = arith.constant 0 : index
    %c0_22 = arith.constant 0 : index
    %41 = vector.load %arg2[%c2, %c0_21, %c0_22] : memref<5x128x128xf32, #tpu.memory_space<vmem>>, vector<1x128x128xf32>
    %42 = vector.shape_cast %41 : vector<1x128x128xf32> to vector<128x128xf32>
    %cst_23 = arith.constant dense<0.000000e+00> : vector<8x128xf32>
    %43 = tpu.matmul %40, %42, %cst_23 {dimension_numbers = #tpu.dot_dimension_numbers<[1], [0], [0], [1], [0, 0, 1, 1], [], []>} : vector<8x128xf32>, vector<128x128xf32>, vector<8x128xf32> -> vector<8x128xf32>
    %c2_24 = arith.constant 2 : index
    %c0_25 = arith.constant 0 : index
    %c0_26 = arith.constant 0 : index
    %44 = vector.load %arg3[%c2_24, %c0_25, %c0_26] : memref<5x1x128xf32, #tpu.memory_space<vmem>>, vector<1x1x128xf32>
    %45 = vector.shape_cast %44 : vector<1x1x128xf32> to vector<1x128xf32>
    %46 = vector.broadcast %45 : vector<1x128xf32> to vector<8x128xf32>
    %47 = arith.addf %43, %46 : vector<8x128xf32>
    %cst_27 = arith.constant 5.000000e-01 : f32
    %48 = vector.broadcast %cst_27 : f32 to vector<8x128xf32>
    %49 = arith.mulf %48, %47 : vector<8x128xf32>
    %cst_28 = arith.constant 4.471500e-02 : f32
    %50 = vector.broadcast %cst_28 : f32 to vector<8x128xf32>
    %51 = arith.mulf %50, %47 : vector<8x128xf32>
    %52 = arith.mulf %51, %47 : vector<8x128xf32>
    %53 = arith.mulf %52, %47 : vector<8x128xf32>
    %54 = arith.addf %47, %53 : vector<8x128xf32>
    %cst_29 = arith.constant 0.797884583 : f32
    %55 = vector.broadcast %cst_29 : f32 to vector<8x128xf32>
    %56 = arith.mulf %55, %54 : vector<8x128xf32>
    %57 = math.tanh %56 : vector<8x128xf32>
    %cst_30 = arith.constant 1.000000e+00 : f32
    %58 = vector.broadcast %cst_30 : f32 to vector<8x128xf32>
    %59 = arith.addf %58, %57 : vector<8x128xf32>
    %60 = arith.mulf %49, %59 : vector<8x128xf32>
    %c3 = arith.constant 3 : index
    %c0_31 = arith.constant 0 : index
    %c0_32 = arith.constant 0 : index
    %61 = vector.load %arg2[%c3, %c0_31, %c0_32] : memref<5x128x128xf32, #tpu.memory_space<vmem>>, vector<1x128x128xf32>
    %62 = vector.shape_cast %61 : vector<1x128x128xf32> to vector<128x128xf32>
    %cst_33 = arith.constant dense<0.000000e+00> : vector<8x128xf32>
    %63 = tpu.matmul %60, %62, %cst_33 {dimension_numbers = #tpu.dot_dimension_numbers<[1], [0], [0], [1], [0, 0, 1, 1], [], []>} : vector<8x128xf32>, vector<128x128xf32>, vector<8x128xf32> -> vector<8x128xf32>
    %c3_34 = arith.constant 3 : index
    %c0_35 = arith.constant 0 : index
    %c0_36 = arith.constant 0 : index
    %64 = vector.load %arg3[%c3_34, %c0_35, %c0_36] : memref<5x1x128xf32, #tpu.memory_space<vmem>>, vector<1x1x128xf32>
    %65 = vector.shape_cast %64 : vector<1x1x128xf32> to vector<1x128xf32>
    %66 = vector.broadcast %65 : vector<1x128xf32> to vector<8x128xf32>
    %67 = arith.addf %63, %66 : vector<8x128xf32>
    %cst_37 = arith.constant 5.000000e-01 : f32
    %68 = vector.broadcast %cst_37 : f32 to vector<8x128xf32>
    %69 = arith.mulf %68, %67 : vector<8x128xf32>
    %cst_38 = arith.constant 4.471500e-02 : f32
    %70 = vector.broadcast %cst_38 : f32 to vector<8x128xf32>
    %71 = arith.mulf %70, %67 : vector<8x128xf32>
    %72 = arith.mulf %71, %67 : vector<8x128xf32>
    %73 = arith.mulf %72, %67 : vector<8x128xf32>
    %74 = arith.addf %67, %73 : vector<8x128xf32>
    %cst_39 = arith.constant 0.797884583 : f32
    %75 = vector.broadcast %cst_39 : f32 to vector<8x128xf32>
    %76 = arith.mulf %75, %74 : vector<8x128xf32>
    %77 = math.tanh %76 : vector<8x128xf32>
    %cst_40 = arith.constant 1.000000e+00 : f32
    %78 = vector.broadcast %cst_40 : f32 to vector<8x128xf32>
    %79 = arith.addf %78, %77 : vector<8x128xf32>
    %80 = arith.mulf %69, %79 : vector<8x128xf32>
    %c4 = arith.constant 4 : index
    %c0_41 = arith.constant 0 : index
    %c0_42 = arith.constant 0 : index
    %81 = vector.load %arg2[%c4, %c0_41, %c0_42] : memref<5x128x128xf32, #tpu.memory_space<vmem>>, vector<1x128x128xf32>
    %82 = vector.shape_cast %81 : vector<1x128x128xf32> to vector<128x128xf32>
    %cst_43 = arith.constant dense<0.000000e+00> : vector<8x128xf32>
    %83 = tpu.matmul %80, %82, %cst_43 {dimension_numbers = #tpu.dot_dimension_numbers<[1], [0], [0], [1], [0, 0, 1, 1], [], []>} : vector<8x128xf32>, vector<128x128xf32>, vector<8x128xf32> -> vector<8x128xf32>
    %c4_44 = arith.constant 4 : index
    %c0_45 = arith.constant 0 : index
    %c0_46 = arith.constant 0 : index
    %84 = vector.load %arg3[%c4_44, %c0_45, %c0_46] : memref<5x1x128xf32, #tpu.memory_space<vmem>>, vector<1x1x128xf32>
    %85 = vector.shape_cast %84 : vector<1x1x128xf32> to vector<1x128xf32>
    %86 = vector.broadcast %85 : vector<1x128xf32> to vector<8x128xf32>
    %87 = arith.addf %83, %86 : vector<8x128xf32>
    %cst_47 = arith.constant 5.000000e-01 : f32
    %88 = vector.broadcast %cst_47 : f32 to vector<8x128xf32>
    %89 = arith.mulf %88, %87 : vector<8x128xf32>
    %cst_48 = arith.constant 4.471500e-02 : f32
    %90 = vector.broadcast %cst_48 : f32 to vector<8x128xf32>
    %91 = arith.mulf %90, %87 : vector<8x128xf32>
    %92 = arith.mulf %91, %87 : vector<8x128xf32>
    %93 = arith.mulf %92, %87 : vector<8x128xf32>
    %94 = arith.addf %87, %93 : vector<8x128xf32>
    %cst_49 = arith.constant 0.797884583 : f32
    %95 = vector.broadcast %cst_49 : f32 to vector<8x128xf32>
    %96 = arith.mulf %95, %94 : vector<8x128xf32>
    %97 = math.tanh %96 : vector<8x128xf32>
    %cst_50 = arith.constant 1.000000e+00 : f32
    %98 = vector.broadcast %cst_50 : f32 to vector<8x128xf32>
    %99 = arith.addf %98, %97 : vector<8x128xf32>
    %100 = arith.mulf %89, %99 : vector<8x128xf32>
    %101 = arith.addf %100, %0 : vector<8x128xf32>
    %c0_51 = arith.constant 0 : index
    %c0_52 = arith.constant 0 : index
    %102 = vector.load %arg4[%c0_51, %c0_52] : memref<8x128xf32, #tpu.memory_space<vmem>>, vector<8x128xf32>
    tpu.vector_store %arg4[%c0_51, %c0_52], %101 {strides = array<i32>} : memref<8x128xf32, #tpu.memory_space<vmem>>, vector<8x128xf32>,
    return
  }
  func.func @transform_0(%arg0: i32) -> (i32, i32) {
    %c0_i32 = arith.constant 0 : i32
    %c0_i32_0 = arith.constant 0 : i32
    return %arg0, %c0_i32 : i32, i32
  }
  func.func @transform_1(%arg0: i32) -> (i32, i32, i32) {
    %c0_i32 = arith.constant 0 : i32
    %c0_i32_0 = arith.constant 0 : i32
    %c0_i32_1 = arith.constant 0 : i32
    %c0_i32_2 = arith.constant 0 : i32
    return %c0_i32, %c0_i32_0, %c0_i32_1 : i32, i32, i32
  }
  func.func @transform_2(%arg0: i32) -> (i32, i32, i32) {
    %c0_i32 = arith.constant 0 : i32
    %c0_i32_0 = arith.constant 0 : i32
    %c0_i32_1 = arith.constant 0 : i32
    %c0_i32_2 = arith.constant 0 : i32
    return %c0_i32, %c0_i32_0, %c0_i32_1 : i32, i32, i32
  }
  func.func @transform_3(%arg0: i32) -> (i32, i32) {
    %c0_i32 = arith.constant 0 : i32
    %c0_i32_0 = arith.constant 0 : i32
    return %arg0, %c0_i32 : i32, i32
  }
}

</mosaic_0001>

<llo_original>
// kernel: tpu_custom_call.1
$region0: #{tpu_custom_call.1}
  #allocation0 [shape = 'u32[]', space=smem, size = 0x4, offset = 0x4, fixed_abs, tag = 'smem constant byte address 0x4 - core index']
  #allocation1 [shape = 'u32[144,128]{1,0:T(1,128)}', space=vmem, size = 0x12000, scoped, tag = 'internal scratch']
  %s0 = inlined_call_operand.hbm [shape: f32[16,128], index: 0, kind: input, shape index: {}]
  %s1 = inlined_call_operand.hbm [shape: f32[5,128,128], index: 1, kind: input, shape index: {}]
  %s2 = inlined_call_operand.hbm [shape: f32[5,1,128], index: 2, kind: input, shape index: {}]
  %s3 = inlined_call_operand.hbm [shape: f32[16,128], index: 3, kind: output, shape index: {}]
  %s4 = sld [smem:[#allocation0]]
  $region57: #{tpu_custom_call.1} parent=0
    _
  %s6 = ssub.s32 1, %s4
  %s7 = scalar_select 0, %s6, %s4
  $region1: #{tpu_custom_call.1} parent=0
    #allocation2 [shape = 'u8[8192]{0}', space=vmem, size = 0x2000, scoped, tag = 'input window, operand 0']
    #allocation3 [shape = 's32[2]{0}', space=sflag, size = 0x8, scoped, tag = 'scoped memory for tpu_custom_call.1']
    #allocation4 [shape = 's32[2]{0}', space=sflag, size = 0x8, scoped, tag = 'scoped memory for tpu_custom_call.1']
    #allocation5 [shape = 'u8[327680]{0}', space=vmem, size = 0x50000, scoped, tag = 'input window, operand 1, single buffered']
    #allocation6 [shape = 's32[1]{0}', space=sflag, size = 0x4, scoped, tag = 'scoped memory for tpu_custom_call.1']
    #allocation7 [shape = 'u8[2560]{0}', space=vmem, size = 0xc00, scoped, tag = 'input window, operand 2, single buffered']
    #allocation8 [shape = 'u8[8192]{0}', space=vmem, size = 0x2000, scoped, tag = 'output window, operand 0']
    %8 = vsyncpa [#allocation3], 0
    %s9 = scalar_lea.sflag [#allocation3], 1
    %10 = vsyncpa %s9, 0
    %11 = vsyncpa [#allocation6], 0
    %12 = vsyncpa [#allocation4], 0
    %s13 = scalar_lea.sflag [#allocation4], 1
    %14 = vsyncpa %s13, 0
    loop: start=0, step=1, limit=4
    $region2: #{tpu_custom_call.1} parent=1 // loop_pre_header
      _
    $region3: #{tpu_custom_call.1} parent=1 // loop_header
      %s16 = sphi 0, %s20
      %p17 = scmp.ge.s32.totalorder %s16, 4
      %s26 = sphi 0, %s28
      %s29 = sphi 0, %s26
      %s30 = sphi 0, %s29
      %s46 = sphi 0, %s30
      %s50 = sphi 0, %s50
      %s52 = sphi 0, %s50
      %s53 = sphi 0, %s52
      %s67 = sphi 0, %s53
      %s71 = sphi 0, %s71
      %s73 = sphi 0, %s71
      %s74 = sphi 0, %s73
      %s88 = sphi 0, %s74
      %s94 = sphi 0, %s96
      %s97 = sphi 0, %s94
      %s98 = sphi 0, %s97
      %s114 = sphi 0, %s98
    $region4: #{tpu_custom_call.1} parent=1 // loop_header_branch
      %19 = sbr.rel (%p17) target = $region8
    $region5: #{tpu_custom_call.1} parent=1 // loop_body
      %s21 = ssub.s32 %s16, 1
      %s22 = ssub.s32 %s16, 2
      %s23 = sadd.s32 %s16, 1
      %s24 = ssub.s32 %s16, %s23
      %p25 = scmp.eq.s32.totalorder %s24, 0
      %s27 = sadd.s32 %s26, 1
      %s28 = scalar_select %p25, %s26, %s27
      %p31 = pneg %p25
      %p32 = scmp.eq.s32.totalorder %s16, 1
      %p33 = por %p31, %p32
      %p34 = scmp.ne.s32.totalorder %s26, %s29
      %p35 = scmp.eq.s32.totalorder %s16, 0
      %p36 = por %p34, %p35
      %p37 = scmp.ne.s32.totalorder %s26, %s29
      %p38 = scmp.eq.s32.totalorder %s21, 1
      %p39 = por %p37, %p38
      %p40 = scmp.ne.s32.totalorder %s29, %s30
      %p41 = scmp.eq.s32.totalorder %s21, 0
      %p42 = por %p40, %p41
      %p43 = scmp.ne.s32.totalorder %s29, %s30
      %p44 = scmp.eq.s32.totalorder %s22, 1
      %p45 = por %p43, %p44
      %p47 = scmp.ne.s32.totalorder %s30, %s46
      %p48 = scmp.eq.s32.totalorder %s22, 0
      %p49 = por %p47, %p48
      %s51 = sadd.s32 %s50, 1
      %p54 = scmp.eq.s32.totalorder %s16, 1
      %p55 = scmp.ne.s32.totalorder %s50, %s52
      %p56 = scmp.eq.s32.totalorder %s16, 0
      %p57 = por %p55, %p56
      %p58 = scmp.ne.s32.totalorder %s50, %s52
      %p59 = scmp.eq.s32.totalorder %s21, 1
      %p60 = por %p58, %p59
      %p61 = scmp.ne.s32.totalorder %s52, %s53
      %p62 = scmp.eq.s32.totalorder %s21, 0
      %p63 = por %p61, %p62
      %p64 = scmp.ne.s32.totalorder %s52, %s53
      %p65 = scmp.eq.s32.totalorder %s22, 1
      %p66 = por %p64, %p65
      %p68 = scmp.ne.s32.totalorder %s53, %s67
      %p69 = scmp.eq.s32.totalorder %s22, 0
      %p70 = por %p68, %p69
      %s72 = sadd.s32 %s71, 1
      %p75 = scmp.eq.s32.totalorder %s16, 1
      %p76 = scmp.ne.s32.totalorder %s71, %s73
      %p77 = scmp.eq.s32.totalorder %s16, 0
      %p78 = por %p76, %p77
      %p79 = scmp.ne.s32.totalorder %s71, %s73
      %p80 = scmp.eq.s32.totalorder %s21, 1
      %p81 = por %p79, %p80
      %p82 = scmp.ne.s32.totalorder %s73, %s74
      %p83 = scmp.eq.s32.totalorder %s21, 0
      %p84 = por %p82, %p83
      %p85 = scmp.ne.s32.totalorder %s73, %s74
      %p86 = scmp.eq.s32.totalorder %s22, 1
      %p87 = por %p85, %p86
      %p89 = scmp.ne.s32.totalorder %s74, %s88
      %p90 = scmp.eq.s32.totalorder %s22, 0
      %p91 = por %p89, %p90
      %s92 = ssub.s32 %s16, %s23
      %p93 = scmp.eq.s32.totalorder %s92, 0
      %s95 = sadd.s32 %s94, 1
      %s96 = scalar_select %p93, %s94, %s95
      %p99 = pneg %p93
      %p100 = scmp.eq.s32.totalorder %s16, 1
      %p101 = por %p99, %p100
      %p102 = scmp.ne.s32.totalorder %s94, %s97
      %p103 = scmp.eq.s32.totalorder %s16, 0
      %p104 = por %p102, %p103
      %p105 = scmp.ne.s32.totalorder %s94, %s97
      %p106 = scmp.eq.s32.totalorder %s21, 1
      %p107 = por %p105, %p106
      %p108 = scmp.ne.s32.totalorder %s97, %s98
      %p109 = scmp.eq.s32.totalorder %s21, 0
      %p110 = por %p108, %p109
      %p111 = scmp.ne.s32.totalorder %s97, %s98
      %p112 = scmp.eq.s32.totalorder %s22, 1
      %p113 = por %p111, %p112
      %p115 = scmp.ne.s32.totalorder %s98, %s114
      %p116 = scmp.eq.s32.totalorder %s22, 0
      %p117 = por %p115, %p116
      %p118 = scmp.le.s32.totalorder 1, %s16
      %p119 = scmp.lt.s32.totalorder %s16, 3
      %p120 = pnand %p118, %p119
      %p121 = pneg %p120
      // Predicated region
      $region9: #{tpu_custom_call.1} parent=5 // pred_check
        _
      $region10: #{tpu_custom_call.1} parent=5 // pred_check_branch
        %123 = sbr.rel (%p120) target = $region12
      $region11: #{tpu_custom_call.1} parent=5 // pred_region
        %s124 = ssub.s32 %s16, 1
        // Predicated region
        $region13: #{tpu_custom_call.1} parent=11 // pred_check
          %p125 = pneg %p63
        $region14: #{tpu_custom_call.1} parent=11 // pred_check_branch
          %127 = sbr.rel (%p125) target = $region16
        $region15: #{tpu_custom_call.1} parent=11 // pred_region
          %s129 = ssub.s32 10240, 10240
          %130 = vsyncadd [#allocation6], %s129
          %s131 = sshll.u32 [#allocation5], 4
          %s132 = int_to_ptr.vmem [resolvable:$true] %s131
          %137 = dma.hbm_to_vmem [thread:$0]  %s1, 10240, %s132, [#allocation6], 128, 128, 8
        $region16: #{tpu_custom_call.1} parent=11 // pred_fallthru
          _
        // Predicated region
        $region17: #{tpu_custom_call.1} parent=11 // pred_check
          %p138 = pneg %p84
        $region18: #{tpu_custom_call.1} parent=11 // pred_check_branch
          %140 = sbr.rel (%p138) target = $region20
        $region19: #{tpu_custom_call.1} parent=11 // pred_region
          %s142 = ssub.s32 80, 80
          %143 = vsyncadd [#allocation6], %s142
          %s144 = sshll.u32 [#allocation7], 4
          %s145 = int_to_ptr.vmem [resolvable:$true] %s144
          %150 = dma.hbm_to_vmem [thread:$0]  %s2, 80, %s145, [#allocation6], 16, 16, 1
        $region20: #{tpu_custom_call.1} parent=11 // pred_fallthru
          _
      $region12: #{tpu_custom_call.1} parent=5 // pred_fallthru
        _
      %p151 = scmp.lt.s32.totalorder %s16, 2
      // Predicated region
      $region21: #{tpu_custom_call.1} parent=5 // pred_check
        %p152 = pneg %p151
      $region22: #{tpu_custom_call.1} parent=5 // pred_check_branch
        %154 = sbr.rel (%p152) target = $region24
      $region23: #{tpu_custom_call.1} parent=5 // pred_region
        // Predicated region
        $region25: #{tpu_custom_call.1} parent=23 // pred_check
          %p155 = pneg %p36
        $region26: #{tpu_custom_call.1} parent=23 // pred_check_branch
          %157 = sbr.rel (%p155) target = $region28
        $region27: #{tpu_custom_call.1} parent=23 // pred_region
          %s158 = sand.u32 %s26, 1
          %s159 = scalar_lea.sflag [#allocation3], %s158
          %s160 = sand.u32 %s26, 1
          %s161 = smul.addr %s160, 8
          %s162 = scalar_lea.vmem [#allocation2], %s161
          %s164 = ssub.s32 128, 128
          %165 = vsyncadd %s159, %s164
          %s166 = smul.addr %s16, 128
          %s167 = scalar_lea.hbm %s0, %s166
          %s169 = sshll.u32 %s162, 4
          %s170 = int_to_ptr.vmem [resolvable:$true] %s169
          %172 = dma.hbm_to_vmem [thread:$0]  %s167, 128, %s170, %s159
        $region28: #{tpu_custom_call.1} parent=23 // pred_fallthru
          _
      $region24: #{tpu_custom_call.1} parent=5 // pred_fallthru
        _
      %p173 = scmp.le.s32.totalorder 1, %s16
      %p174 = scmp.lt.s32.totalorder %s16, 3
      %p175 = pnand %p173, %p174
      %p176 = pneg %p175
      // Predicated region
      $region29: #{tpu_custom_call.1} parent=5 // pred_check
        _
      $region30: #{tpu_custom_call.1} parent=5 // pred_check_branch
        %178 = sbr.rel (%p175) target = $region32
      $region31: #{tpu_custom_call.1} parent=5 // pred_region
        %s179 = ssub.s32 %s16, 1
        %s180 = sand.u32 %s29, 1
        %s181 = scalar_lea.sflag [#allocation3], %s180
        %s182 = sand.u32 %s29, 1
        %s183 = smul.addr %s182, 8
        %s184 = scalar_lea.vmem [#allocation2], %s183
        // Predicated region
        $region33: #{tpu_custom_call.1} parent=31 // pred_check
          %p185 = pneg %p42
        $region34: #{tpu_custom_call.1} parent=31 // pred_check_branch
          %187 = sbr.rel (%p185) target = $region36
        $region35: #{tpu_custom_call.1} parent=31 // pred_region
          %188 = dma.done %s181, 128
        $region36: #{tpu_custom_call.1} parent=31 // pred_fallthru
          _
        // Predicated region
        $region37: #{tpu_custom_call.1} parent=31 // pred_check
          %p189 = pneg %p63
        $region38: #{tpu_custom_call.1} parent=31 // pred_check_branch
          %191 = sbr.rel (%p189) target = $region40
        $region39: #{tpu_custom_call.1} parent=31 // pred_region
          %192 = dma.done [#allocation6], 10240
        $region40: #{tpu_custom_call.1} parent=31 // pred_fallthru
          _
        // Predicated region
        $region41: #{tpu_custom_call.1} parent=31 // pred_check
          %p193 = pneg %p84
        $region42: #{tpu_custom_call.1} parent=31 // pred_check_branch
          %195 = sbr.rel (%p193) target = $region44
        $region43: #{tpu_custom_call.1} parent=31 // pred_region
          %196 = dma.done [#allocation6], 80
        $region44: #{tpu_custom_call.1} parent=31 // pred_fallthru
          _
        %s197 = sand.u32 %s29, 1
        %s198 = scalar_lea.sflag [#allocation3], %s197
        %s199 = sand.u32 %s29, 1
        %s200 = smul.addr %s199, 8
        %s201 = scalar_lea.vmem [#allocation2], %s200
        %p202 = pneg %p42
        %p203 = pneg %p39
        %p204 = pneg %p63
        %p205 = pneg %p60
        %p206 = pneg %p84
        %p207 = pneg %p81
        %p208 = pneg %p110
        %p209 = pneg %p107
        %s210 = sand.u32 %s97, 1
        %s211 = scalar_lea.sflag [#allocation4], %s210
        %s212 = sand.u32 %s97, 1
        %s213 = smul.addr %s212, 8
        %s214 = scalar_lea.vmem [#allocation8], %s213
        %v215 = vld [vmem:[%s184] sm:$0xff]
        %v216 = vld [vmem:[#allocation5] sm:$0xff]
        %v217 = vld [vmem:[#allocation5 + $0x8] sm:$0xff]
        %v218 = vld [vmem:[#allocation5 + $0x10] sm:$0xff]
        %v219 = vld [vmem:[#allocation5 + $0x18] sm:$0xff]
        %v220 = vld [vmem:[#allocation5 + $0x20] sm:$0xff]
        %v221 = vld [vmem:[#allocation5 + $0x28] sm:$0xff]
        %v222 = vld [vmem:[#allocation5 + $0x30] sm:$0xff]
        %v223 = vld [vmem:[#allocation5 + $0x38] sm:$0xff]
        %v224 = vld [vmem:[#allocation5 + $0x40] sm:$0xff]
        %v225 = vld [vmem:[#allocation5 + $0x48] sm:$0xff]
        %v226 = vld [vmem:[#allocation5 + $0x50] sm:$0xff]
        %v227 = vld [vmem:[#allocation5 + $0x58] sm:$0xff]
        %v228 = vld [vmem:[#allocation5 + $0x60] sm:$0xff]
        %v229 = vld [vmem:[#allocation5 + $0x68] sm:$0xff]
        %v230 = vld [vmem:[#allocation5 + $0x70] sm:$0xff]
        %v231 = vld [vmem:[#allocation5 + $0x78] sm:$0xff]
        %v232 = vld [vmem:[#allocation7] sm:$0x1]
        %v234 = vlaneseq
        %v235 = vshrl.u32 %v234, 7
        %v236 = vsub.s32 0, %v235
        %v237 = vrot.slane %v232, %v236
        %239 = vmatprep.subr.mxu0 0.0
        %240 = vmatpush1.msra.mxu0 %v231
        %241 = vmatprep.subr.mxu0 0.0
        %242 = vmatpush1.msra.mxu0 %v230
        %243 = vmatprep.subr.mxu0 0.0
        %244 = vmatpush1.msra.mxu0 %v229
        %245 = vmatprep.subr.mxu0 0.0
        %246 = vmatpush1.msra.mxu0 %v228
        %247 = vmatprep.subr.mxu0 0.0
        %248 = vmatpush1.msra.mxu0 %v227
        %249 = vmatprep.subr.mxu0 0.0
        %250 = vmatpush1.msra.mxu0 %v226
        %251 = vmatprep.subr.mxu0 0.0
        %252 = vmatpush1.msra.mxu0 %v225
        %253 = vmatprep.subr.mxu0 0.0
        %254 = vmatpush1.msra.mxu0 %v224
        %255 = vmatprep.subr.mxu0 0.0
        %256 = vmatpush1.msra.mxu0 %v223
        %257 = vmatprep.subr.mxu0 0.0
        %258 = vmatpush1.msra.mxu0 %v222
        %259 = vmatprep.subr.mxu0 0.0
        %260 = vmatpush1.msra.mxu0 %v221
        %261 = vmatprep.subr.mxu0 0.0
        %262 = vmatpush1.msra.mxu0 %v220
        %263 = vmatprep.subr.mxu0 0.0
        %264 = vmatpush1.msra.mxu0 %v219
        %265 = vmatprep.subr.mxu0 0.0
        %266 = vmatpush1.msra.mxu0 %v218
        %267 = vmatprep.subr.mxu0 0.0
        %268 = vmatpush1.msra.mxu0 %v217
        %269 = vmatprep.subr.mxu0 0.0
        %270 = vmatpush1.msra.mxu0 %v216
        %271 = vmatprep.subr.mxu0 0.0
        %272 = vmatpush2.msra.mxu0 0.0
        %273 = vmatprep.subr.mxu0 0.0
        %274 = vmatpush2.msra.mxu0 0.0
        %275 = vmatprep.subr.mxu0 0.0
        %276 = vmatpush2.msra.mxu0 0.0
        %277 = vmatprep.subr.mxu0 0.0
        %278 = vmatpush2.msra.mxu0 0.0
        %279 = vmatprep.subr.mxu0 0.0
        %280 = vmatpush2.msra.mxu0 0.0
        %281 = vmatprep.subr.mxu0 0.0
        %282 = vmatpush2.msra.mxu0 0.0
        %283 = vmatprep.subr.mxu0 0.0
        %284 = vmatpush2.msra.mxu0 0.0
        %285 = vmatprep.subr.mxu0 0.0
        %286 = vmatpush2.msra.mxu0 0.0
        %287 = vmatprep.subr.mxu0 0.0
        %288 = vmatpush2.msra.mxu0 0.0
        %289 = vmatprep.subr.mxu0 0.0
        %290 = vmatpush2.msra.mxu0 0.0
        %291 = vmatprep.subr.mxu0 0.0
        %292 = vmatpush2.msra.mxu0 0.0
        %293 = vmatprep.subr.mxu0 0.0
        %294 = vmatpush2.msra.mxu0 0.0
        %295 = vmatprep.subr.mxu0 0.0
        %296 = vmatpush2.msra.mxu0 0.0
        %297 = vmatprep.subr.mxu0 0.0
        %298 = vmatpush2.msra.mxu0 0.0
        %299 = vmatprep.subr.mxu0 0.0
        %300 = vmatpush2.msra.mxu0 0.0
        %301 = vmatprep.subr.mxu0 0.0
        %302 = vmatpush2.msra.mxu0 0.0
        %303 = vmatprep.mubr.f32.mxu0 0.0
        %304 = vmatmul.mubr.f32.gmra.mxu0 %v215
        %v305 = vpop.f32.mrf.mxu0
        %v306 = vadd.f32 %v237, %v305
        %v307 = vpop.f32.mrf.mxu0
        %308 = vdwg.mxu0
        %v309 = vmul.f32 %v306, 0.5
        %v310 = vmul.f32 %v306, 0.044715
        %v311 = vmul.f32 %v310, %v306
        %v312 = vmul.f32 %v311, %v306
        %v313 = vadd.f32 %v306, %v312
        %v314 = vmul.f32 %v313, 0.7978846
        %v315 = vtanh.pop %v314
        %v316 = vadd.f32 %v315, 1.0
        %v317 = vmul.f32 %v309, %v316
        %s318 = scalar_lea.vmem [#allocation5], 128
        %v319 = vld [vmem:[%s318] sm:$0xff]
        %v320 = vld [vmem:[%s318 + $0x8] sm:$0xff]
        %v321 = vld [vmem:[%s318 + $0x10] sm:$0xff]
        %v322 = vld [vmem:[%s318 + $0x18] sm:$0xff]
        %v323 = vld [vmem:[%s318 + $0x20] sm:$0xff]
        %v324 = vld [vmem:[%s318 + $0x28] sm:$0xff]
        %v325 = vld [vmem:[%s318 + $0x30] sm:$0xff]
        %v326 = vld [vmem:[%s318 + $0x38] sm:$0xff]
        %v327 = vld [vmem:[%s318 + $0x40] sm:$0xff]
        %v328 = vld [vmem:[%s318 + $0x48] sm:$0xff]
        %v329 = vld [vmem:[%s318 + $0x50] sm:$0xff]
        %v330 = vld [vmem:[%s318 + $0x58] sm:$0xff]
        %v331 = vld [vmem:[%s318 + $0x60] sm:$0xff]
        %v332 = vld [vmem:[%s318 + $0x68] sm:$0xff]
        %v333 = vld [vmem:[%s318 + $0x70] sm:$0xff]
        %v334 = vld [vmem:[%s318 + $0x78] sm:$0xff]
        %s335 = scalar_lea.vmem [#allocation7], 1
        %v336 = vld [vmem:[%s335] sm:$0x1]
        %v338 = vlaneseq
        %v339 = vshrl.u32 %v338, 7
        %v340 = vsub.s32 0, %v339
        %v341 = vrot.slane %v336, %v340
        %343 = vmatprep.subr.mxu0 0.0
        %344 = vmatpush1.msra.mxu0 %v334
        %345 = vmatprep.subr.mxu0 0.0
        %346 = vmatpush1.msra.mxu0 %v333
        %347 = vmatprep.subr.mxu0 0.0
        %348 = vmatpush1.msra.mxu0 %v332
        %349 = vmatprep.subr.mxu0 0.0
        %350 = vmatpush1.msra.mxu0 %v331
        %351 = vmatprep.subr.mxu0 0.0
        %352 = vmatpush1.msra.mxu0 %v330
        %353 = vmatprep.subr.mxu0 0.0
        %354 = vmatpush1.msra.mxu0 %v329
        %355 = vmatprep.subr.mxu0 0.0
        %356 = vmatpush1.msra.mxu0 %v328
        %357 = vmatprep.subr.mxu0 0.0
        %358 = vmatpush1.msra.mxu0 %v327
        %359 = vmatprep.subr.mxu0 0.0
        %360 = vmatpush1.msra.mxu0 %v326
        %361 = vmatprep.subr.mxu0 0.0
        %362 = vmatpush1.msra.mxu0 %v325
        %363 = vmatprep.subr.mxu0 0.0
        %364 = vmatpush1.msra.mxu0 %v324
        %365 = vmatprep.subr.mxu0 0.0
        %366 = vmatpush1.msra.mxu0 %v323
        %367 = vmatprep.subr.mxu0 0.0
        %368 = vmatpush1.msra.mxu0 %v322
        %369 = vmatprep.subr.mxu0 0.0
        %370 = vmatpush1.msra.mxu0 %v321
        %371 = vmatprep.subr.mxu0 0.0
        %372 = vmatpush1.msra.mxu0 %v320
        %373 = vmatprep.subr.mxu0 0.0
        %374 = vmatpush1.msra.mxu0 %v319
        %375 = vmatprep.subr.mxu0 0.0
        %376 = vmatpush2.msra.mxu0 0.0
        %377 = vmatprep.subr.mxu0 0.0
        %378 = vmatpush2.msra.mxu0 0.0
        %379 = vmatprep.subr.mxu0 0.0
        %380 = vmatpush2.msra.mxu0 0.0
        %381 = vmatprep.subr.mxu0 0.0
        %382 = vmatpush2.msra.mxu0 0.0
        %383 = vmatprep.subr.mxu0 0.0
        %384 = vmatpush2.msra.mxu0 0.0
        %385 = vmatprep.subr.mxu0 0.0
        %386 = vmatpush2.msra.mxu0 0.0
        %387 = vmatprep.subr.mxu0 0.0
        %388 = vmatpush2.msra.mxu0 0.0
        %389 = vmatprep.subr.mxu0 0.0
        %390 = vmatpush2.msra.mxu0 0.0
        %391 = vmatprep.subr.mxu0 0.0
        %392 = vmatpush2.msra.mxu0 0.0
        %393 = vmatprep.subr.mxu0 0.0
        %394 = vmatpush2.msra.mxu0 0.0
        %395 = vmatprep.subr.mxu0 0.0
        %396 = vmatpush2.msra.mxu0 0.0
        %397 = vmatprep.subr.mxu0 0.0
        %398 = vmatpush2.msra.mxu0 0.0
        %399 = vmatprep.subr.mxu0 0.0
        %400 = vmatpush2.msra.mxu0 0.0
        %401 = vmatprep.subr.mxu0 0.0
        %402 = vmatpush2.msra.mxu0 0.0
        %403 = vmatprep.subr.mxu0 0.0
        %404 = vmatpush2.msra.mxu0 0.0
        %405 = vmatprep.subr.mxu0 0.0
        %406 = vmatpush2.msra.mxu0 0.0
        %407 = vmatprep.mubr.f32.mxu0 0.0
        %408 = vmatmul.mubr.f32.gmra.mxu0 %v317
        %v409 = vpop.f32.mrf.mxu0
        %v410 = vadd.f32 %v341, %v409
        %v411 = vpop.f32.mrf.mxu0
        %412 = vdwg.mxu0
        %v413 = vmul.f32 %v410, 0.5
        %v414 = vmul.f32 %v410, 0.044715
        %v415 = vmul.f32 %v414, %v410
        %v416 = vmul.f32 %v415, %v410
        %v417 = vadd.f32 %v410, %v416
        %v418 = vmul.f32 %v417, 0.7978846
        %v419 = vtanh.pop %v418
        %v420 = vadd.f32 %v419, 1.0
        %v421 = vmul.f32 %v413, %v420
        %s422 = scalar_lea.vmem [#allocation5], 256
        %v423 = vld [vmem:[%s422] sm:$0xff]
        %v424 = vld [vmem:[%s422 + $0x8] sm:$0xff]
        %v425 = vld [vmem:[%s422 + $0x10] sm:$0xff]
        %v426 = vld [vmem:[%s422 + $0x18] sm:$0xff]
        %v427 = vld [vmem:[%s422 + $0x20] sm:$0xff]
        %v428 = vld [vmem:[%s422 + $0x28] sm:$0xff]
        %v429 = vld [vmem:[%s422 + $0x30] sm:$0xff]
        %v430 = vld [vmem:[%s422 + $0x38] sm:$0xff]
        %v431 = vld [vmem:[%s422 + $0x40] sm:$0xff]
        %v432 = vld [vmem:[%s422 + $0x48] sm:$0xff]
        %v433 = vld [vmem:[%s422 + $0x50] sm:$0xff]
        %v434 = vld [vmem:[%s422 + $0x58] sm:$0xff]
        %v435 = vld [vmem:[%s422 + $0x60] sm:$0xff]
        %v436 = vld [vmem:[%s422 + $0x68] sm:$0xff]
        %v437 = vld [vmem:[%s422 + $0x70] sm:$0xff]
        %v438 = vld [vmem:[%s422 + $0x78] sm:$0xff]
        %s439 = scalar_lea.vmem [#allocation7], 2
        %v440 = vld [vmem:[%s439] sm:$0x1]
        %v442 = vlaneseq
        %v443 = vshrl.u32 %v442, 7
        %v444 = vsub.s32 0, %v443
        %v445 = vrot.slane %v440, %v444
        %447 = vmatprep.subr.mxu0 0.0
        %448 = vmatpush1.msra.mxu0 %v438
        %449 = vmatprep.subr.mxu0 0.0
        %450 = vmatpush1.msra.mxu0 %v437
        %451 = vmatprep.subr.mxu0 0.0
        %452 = vmatpush1.msra.mxu0 %v436
        %453 = vmatprep.subr.mxu0 0.0
        %454 = vmatpush1.msra.mxu0 %v435
        %455 = vmatprep.subr.mxu0 0.0
        %456 = vmatpush1.msra.mxu0 %v434
        %457 = vmatprep.subr.mxu0 0.0
        %458 = vmatpush1.msra.mxu0 %v433
        %459 = vmatprep.subr.mxu0 0.0
        %460 = vmatpush1.msra.mxu0 %v432
        %461 = vmatprep.subr.mxu0 0.0
        %462 = vmatpush1.msra.mxu0 %v431
        %463 = vmatprep.subr.mxu0 0.0
        %464 = vmatpush1.msra.mxu0 %v430
        %465 = vmatprep.subr.mxu0 0.0
        %466 = vmatpush1.msra.mxu0 %v429
        %467 = vmatprep.subr.mxu0 0.0
        %468 = vmatpush1.msra.mxu0 %v428
        %469 = vmatprep.subr.mxu0 0.0
        %470 = vmatpush1.msra.mxu0 %v427
        %471 = vmatprep.subr.mxu0 0.0
        %472 = vmatpush1.msra.mxu0 %v426
        %473 = vmatprep.subr.mxu0 0.0
        %474 = vmatpush1.msra.mxu0 %v425
        %475 = vmatprep.subr.mxu0 0.0
        %476 = vmatpush1.msra.mxu0 %v424
        %477 = vmatprep.subr.mxu0 0.0
        %478 = vmatpush1.msra.mxu0 %v423
        %479 = vmatprep.subr.mxu0 0.0
        %480 = vmatpush2.msra.mxu0 0.0
        %481 = vmatprep.subr.mxu0 0.0
        %482 = vmatpush2.msra.mxu0 0.0
        %483 = vmatprep.subr.mxu0 0.0
        %484 = vmatpush2.msra.mxu0 0.0
        %485 = vmatprep.subr.mxu0 0.0
        %486 = vmatpush2.msra.mxu0 0.0
        %487 = vmatprep.subr.mxu0 0.0
        %488 = vmatpush2.msra.mxu0 0.0
        %489 = vmatprep.subr.mxu0 0.0
        %490 = vmatpush2.msra.mxu0 0.0
        %491 = vmatprep.subr.mxu0 0.0
        %492 = vmatpush2.msra.mxu0 0.0
        %493 = vmatprep.subr.mxu0 0.0
        %494 = vmatpush2.msra.mxu0 0.0
        %495 = vmatprep.subr.mxu0 0.0
        %496 = vmatpush2.msra.mxu0 0.0
        %497 = vmatprep.subr.mxu0 0.0
        %498 = vmatpush2.msra.mxu0 0.0
        %499 = vmatprep.subr.mxu0 0.0
        %500 = vmatpush2.msra.mxu0 0.0
        %501 = vmatprep.subr.mxu0 0.0
        %502 = vmatpush2.msra.mxu0 0.0
        %503 = vmatprep.subr.mxu0 0.0
        %504 = vmatpush2.msra.mxu0 0.0
        %505 = vmatprep.subr.mxu0 0.0
        %506 = vmatpush2.msra.mxu0 0.0
        %507 = vmatprep.subr.mxu0 0.0
        %508 = vmatpush2.msra.mxu0 0.0
        %509 = vmatprep.subr.mxu0 0.0
        %510 = vmatpush2.msra.mxu0 0.0
        %511 = vmatprep.mubr.f32.mxu0 0.0
        %512 = vmatmul.mubr.f32.gmra.mxu0 %v421
        %v513 = vpop.f32.mrf.mxu0
        %v514 = vadd.f32 %v445, %v513
        %v515 = vpop.f32.mrf.mxu0
        %516 = vdwg.mxu0
        %v517 = vmul.f32 %v514, 0.5
        %v518 = vmul.f32 %v514, 0.044715
        %v519 = vmul.f32 %v518, %v514
        %v520 = vmul.f32 %v519, %v514
        %v521 = vadd.f32 %v514, %v520
        %v522 = vmul.f32 %v521, 0.7978846
        %v523 = vtanh.pop %v522
        %v524 = vadd.f32 %v523, 1.0
        %v525 = vmul.f32 %v517, %v524
        %s526 = scalar_lea.vmem [#allocation5], 384
        %v527 = vld [vmem:[%s526] sm:$0xff]
        %v528 = vld [vmem:[%s526 + $0x8] sm:$0xff]
        %v529 = vld [vmem:[%s526 + $0x10] sm:$0xff]
        %v530 = vld [vmem:[%s526 + $0x18] sm:$0xff]
        %v531 = vld [vmem:[%s526 + $0x20] sm:$0xff]
        %v532 = vld [vmem:[%s526 + $0x28] sm:$0xff]
        %v533 = vld [vmem:[%s526 + $0x30] sm:$0xff]
        %v534 = vld [vmem:[%s526 + $0x38] sm:$0xff]
        %v535 = vld [vmem:[%s526 + $0x40] sm:$0xff]
        %v536 = vld [vmem:[%s526 + $0x48] sm:$0xff]
        %v537 = vld [vmem:[%s526 + $0x50] sm:$0xff]
        %v538 = vld [vmem:[%s526 + $0x58] sm:$0xff]
        %v539 = vld [vmem:[%s526 + $0x60] sm:$0xff]
        %v540 = vld [vmem:[%s526 + $0x68] sm:$0xff]
        %v541 = vld [vmem:[%s526 + $0x70] sm:$0xff]
        %v542 = vld [vmem:[%s526 + $0x78] sm:$0xff]
        %s543 = scalar_lea.vmem [#allocation7], 3
        %v544 = vld [vmem:[%s543] sm:$0x1]
        %v546 = vlaneseq
        %v547 = vshrl.u32 %v546, 7
        %v548 = vsub.s32 0, %v547
        %v549 = vrot.slane %v544, %v548
        %551 = vmatprep.subr.mxu0 0.0
        %552 = vmatpush1.msra.mxu0 %v542
        %553 = vmatprep.subr.mxu0 0.0
        %554 = vmatpush1.msra.mxu0 %v541
        %555 = vmatprep.subr.mxu0 0.0
        %556 = vmatpush1.msra.mxu0 %v540
        %557 = vmatprep.subr.mxu0 0.0
        %558 = vmatpush1.msra.mxu0 %v539
        %559 = vmatprep.subr.mxu0 0.0
        %560 = vmatpush1.msra.mxu0 %v538
        %561 = vmatprep.subr.mxu0 0.0
        %562 = vmatpush1.msra.mxu0 %v537
        %563 = vmatprep.subr.mxu0 0.0
        %564 = vmatpush1.msra.mxu0 %v536
        %565 = vmatprep.subr.mxu0 0.0
        %566 = vmatpush1.msra.mxu0 %v535
        %567 = vmatprep.subr.mxu0 0.0
        %568 = vmatpush1.msra.mxu0 %v534
        %569 = vmatprep.subr.mxu0 0.0
        %570 = vmatpush1.msra.mxu0 %v533
        %571 = vmatprep.subr.mxu0 0.0
        %572 = vmatpush1.msra.mxu0 %v532
        %573 = vmatprep.subr.mxu0 0.0
        %574 = vmatpush1.msra.mxu0 %v531
        %575 = vmatprep.subr.mxu0 0.0
        %576 = vmatpush1.msra.mxu0 %v530
        %577 = vmatprep.subr.mxu0 0.0
        %578 = vmatpush1.msra.mxu0 %v529
        %579 = vmatprep.subr.mxu0 0.0
        %580 = vmatpush1.msra.mxu0 %v528
        %581 = vmatprep.subr.mxu0 0.0
        %582 = vmatpush1.msra.mxu0 %v527
        %583 = vmatprep.subr.mxu0 0.0
        %584 = vmatpush2.msra.mxu0 0.0
        %585 = vmatprep.subr.mxu0 0.0
        %586 = vmatpush2.msra.mxu0 0.0
        %587 = vmatprep.subr.mxu0 0.0
        %588 = vmatpush2.msra.mxu0 0.0
        %589 = vmatprep.subr.mxu0 0.0
        %590 = vmatpush2.msra.mxu0 0.0
        %591 = vmatprep.subr.mxu0 0.0
        %592 = vmatpush2.msra.mxu0 0.0
        %593 = vmatprep.subr.mxu0 0.0
        %594 = vmatpush2.msra.mxu0 0.0
        %595 = vmatprep.subr.mxu0 0.0
        %596 = vmatpush2.msra.mxu0 0.0
        %597 = vmatprep.subr.mxu0 0.0
        %598 = vmatpush2.msra.mxu0 0.0
        %599 = vmatprep.subr.mxu0 0.0
        %600 = vmatpush2.msra.mxu0 0.0
        %601 = vmatprep.subr.mxu0 0.0
        %602 = vmatpush2.msra.mxu0 0.0
        %603 = vmatprep.subr.mxu0 0.0
        %604 = vmatpush2.msra.mxu0 0.0
        %605 = vmatprep.subr.mxu0 0.0
        %606 = vmatpush2.msra.mxu0 0.0
        %607 = vmatprep.subr.mxu0 0.0
        %608 = vmatpush2.msra.mxu0 0.0
        %609 = vmatprep.subr.mxu0 0.0
        %610 = vmatpush2.msra.mxu0 0.0
        %611 = vmatprep.subr.mxu0 0.0
        %612 = vmatpush2.msra.mxu0 0.0
        %613 = vmatprep.subr.mxu0 0.0
        %614 = vmatpush2.msra.mxu0 0.0
        %615 = vmatprep.mubr.f32.mxu0 0.0
        %616 = vmatmul.mubr.f32.gmra.mxu0 %v525
        %v617 = vpop.f32.mrf.mxu0
        %v618 = vadd.f32 %v549, %v617
        %v619 = vpop.f32.mrf.mxu0
        %620 = vdwg.mxu0
        %v621 = vmul.f32 %v618, 0.5
        %v622 = vmul.f32 %v618, 0.044715
        %v623 = vmul.f32 %v622, %v618
        %v624 = vmul.f32 %v623, %v618
        %v625 = vadd.f32 %v618, %v624
        %v626 = vmul.f32 %v625, 0.7978846
        %v627 = vtanh.pop %v626
        %v628 = vadd.f32 %v627, 1.0
        %v629 = vmul.f32 %v621, %v628
        %s630 = scalar_lea.vmem [#allocation5], 512
        %v631 = vld [vmem:[%s630] sm:$0xff]
        %v632 = vld [vmem:[%s630 + $0x8] sm:$0xff]
        %v633 = vld [vmem:[%s630 + $0x10] sm:$0xff]
        %v634 = vld [vmem:[%s630 + $0x18] sm:$0xff]
        %v635 = vld [vmem:[%s630 + $0x20] sm:$0xff]
        %v636 = vld [vmem:[%s630 + $0x28] sm:$0xff]
        %v637 = vld [vmem:[%s630 + $0x30] sm:$0xff]
        %v638 = vld [vmem:[%s630 + $0x38] sm:$0xff]
        %v639 = vld [vmem:[%s630 + $0x40] sm:$0xff]
        %v640 = vld [vmem:[%s630 + $0x48] sm:$0xff]
        %v641 = vld [vmem:[%s630 + $0x50] sm:$0xff]
        %v642 = vld [vmem:[%s630 + $0x58] sm:$0xff]
        %v643 = vld [vmem:[%s630 + $0x60] sm:$0xff]
        %v644 = vld [vmem:[%s630 + $0x68] sm:$0xff]
        %v645 = vld [vmem:[%s630 + $0x70] sm:$0xff]
        %v646 = vld [vmem:[%s630 + $0x78] sm:$0xff]
        %s647 = scalar_lea.vmem [#allocation7], 4
        %v648 = vld [vmem:[%s647] sm:$0x1]
        %v650 = vlaneseq
        %v651 = vshrl.u32 %v650, 7
        %v652 = vsub.s32 0, %v651
        %v653 = vrot.slane %v648, %v652
        %655 = vmatprep.subr.mxu0 0.0
        %656 = vmatpush1.msra.mxu0 %v646
        %657 = vmatprep.subr.mxu0 0.0
        %658 = vmatpush1.msra.mxu0 %v645
        %659 = vmatprep.subr.mxu0 0.0
        %660 = vmatpush1.msra.mxu0 %v644
        %661 = vmatprep.subr.mxu0 0.0
        %662 = vmatpush1.msra.mxu0 %v643
        %663 = vmatprep.subr.mxu0 0.0
        %664 = vmatpush1.msra.mxu0 %v642
        %665 = vmatprep.subr.mxu0 0.0
        %666 = vmatpush1.msra.mxu0 %v641
        %667 = vmatprep.subr.mxu0 0.0
        %668 = vmatpush1.msra.mxu0 %v640
        %669 = vmatprep.subr.mxu0 0.0
        %670 = vmatpush1.msra.mxu0 %v639
        %671 = vmatprep.subr.mxu0 0.0
        %672 = vmatpush1.msra.mxu0 %v638
        %673 = vmatprep.subr.mxu0 0.0
        %674 = vmatpush1.msra.mxu0 %v637
        %675 = vmatprep.subr.mxu0 0.0
        %676 = vmatpush1.msra.mxu0 %v636
        %677 = vmatprep.subr.mxu0 0.0
        %678 = vmatpush1.msra.mxu0 %v635
        %679 = vmatprep.subr.mxu0 0.0
        %680 = vmatpush1.msra.mxu0 %v634
        %681 = vmatprep.subr.mxu0 0.0
        %682 = vmatpush1.msra.mxu0 %v633
        %683 = vmatprep.subr.mxu0 0.0
        %684 = vmatpush1.msra.mxu0 %v632
        %685 = vmatprep.subr.mxu0 0.0
        %686 = vmatpush1.msra.mxu0 %v631
        %687 = vmatprep.subr.mxu0 0.0
        %688 = vmatpush2.msra.mxu0 0.0
        %689 = vmatprep.subr.mxu0 0.0
        %690 = vmatpush2.msra.mxu0 0.0
        %691 = vmatprep.subr.mxu0 0.0
        %692 = vmatpush2.msra.mxu0 0.0
        %693 = vmatprep.subr.mxu0 0.0
        %694 = vmatpush2.msra.mxu0 0.0
        %695 = vmatprep.subr.mxu0 0.0
        %696 = vmatpush2.msra.mxu0 0.0
        %697 = vmatprep.subr.mxu0 0.0
        %698 = vmatpush2.msra.mxu0 0.0
        %699 = vmatprep.subr.mxu0 0.0
        %700 = vmatpush2.msra.mxu0 0.0
        %701 = vmatprep.subr.mxu0 0.0
        %702 = vmatpush2.msra.mxu0 0.0
        %703 = vmatprep.subr.mxu0 0.0
        %704 = vmatpush2.msra.mxu0 0.0
        %705 = vmatprep.subr.mxu0 0.0
        %706 = vmatpush2.msra.mxu0 0.0
        %707 = vmatprep.subr.mxu0 0.0
        %708 = vmatpush2.msra.mxu0 0.0
        %709 = vmatprep.subr.mxu0 0.0
        %710 = vmatpush2.msra.mxu0 0.0
        %711 = vmatprep.subr.mxu0 0.0
        %712 = vmatpush2.msra.mxu0 0.0
        %713 = vmatprep.subr.mxu0 0.0
        %714 = vmatpush2.msra.mxu0 0.0
        %715 = vmatprep.subr.mxu0 0.0
        %716 = vmatpush2.msra.mxu0 0.0
        %717 = vmatprep.subr.mxu0 0.0
        %718 = vmatpush2.msra.mxu0 0.0
        %719 = vmatprep.mubr.f32.mxu0 0.0
        %720 = vmatmul.mubr.f32.gmra.mxu0 %v629
        %v721 = vpop.f32.mrf.mxu0
        %v722 = vadd.f32 %v653, %v721
        %v723 = vpop.f32.mrf.mxu0
        %724 = vdwg.mxu0
        %v725 = vmul.f32 %v722, 0.5
        %v726 = vmul.f32 %v722, 0.044715
        %v727 = vmul.f32 %v726, %v722
        %v728 = vmul.f32 %v727, %v722
        %v729 = vadd.f32 %v722, %v728
        %v730 = vmul.f32 %v729, 0.7978846
        %v731 = vtanh.pop %v730
        %v732 = vadd.f32 %v731, 1.0
        %v733 = vmul.f32 %v725, %v732
        %v734 = vadd.f32 %v733, %v215
        %735 = vst [vmem:[%s214] sm:$0xff] %v734
        %s736 = sand.u32 %s97, 1
        %s737 = scalar_lea.sflag [#allocation4], %s736
        %s738 = sand.u32 %s97, 1
        %s739 = smul.addr %s738, 8
        %s740 = scalar_lea.vmem [#allocation8], %s739
        // Predicated region
        $region45: #{tpu_custom_call.1} parent=31 // pred_check
          %p741 = pneg %p107
        $region46: #{tpu_custom_call.1} parent=31 // pred_check_branch
          %743 = sbr.rel (%p741) target = $region48
        $region47: #{tpu_custom_call.1} parent=31 // pred_region
          %s745 = ssub.s32 128, 128
          %746 = vsyncadd %s737, %s745
          %s747 = smul.addr %s21, 128
          %s748 = scalar_lea.hbm %s3, %s747
          %s750 = sshll.u32 %s740, 4
          %s751 = int_to_ptr.vmem [resolvable:$true] %s750
          %753 = dma.vmem_to_hbm [thread:$0]  %s751, 128, %s748, %s737
        $region48: #{tpu_custom_call.1} parent=31 // pred_fallthru
          _
      $region32: #{tpu_custom_call.1} parent=5 // pred_fallthru
        _
      %p754 = scmp.le.s32.totalorder 2, %s16
      // Predicated region
      $region49: #{tpu_custom_call.1} parent=5 // pred_check
        %p755 = pneg %p754
      $region50: #{tpu_custom_call.1} parent=5 // pred_check_branch
        %757 = sbr.rel (%p755) target = $region52
      $region51: #{tpu_custom_call.1} parent=5 // pred_region
        %s758 = ssub.s32 %s16, 2
        // Predicated region
        $region53: #{tpu_custom_call.1} parent=51 // pred_check
          %p759 = pneg %p113
        $region54: #{tpu_custom_call.1} parent=51 // pred_check_branch
          %761 = sbr.rel (%p759) target = $region56
        $region55: #{tpu_custom_call.1} parent=51 // pred_region
          %s762 = sand.u32 %s98, 1
          %s763 = scalar_lea.sflag [#allocation4], %s762
          %s764 = sand.u32 %s98, 1
          %s765 = smul.addr %s764, 8
          %s766 = scalar_lea.vmem [#allocation8], %s765
          %767 = dma.done %s763, 128
        $region56: #{tpu_custom_call.1} parent=51 // pred_fallthru
          _
      $region52: #{tpu_custom_call.1} parent=5 // pred_fallthru
        _
    $region6: #{tpu_custom_call.1} parent=1 // loop_footer
      %s20 = sadd.s32 1, %s16
    $region7: #{tpu_custom_call.1} parent=1 // loop_footer_branch
      %15 = sbr.rel target = $region3
    $region8: #{tpu_custom_call.1} parent=1 // loop_exit
      _
    %768 = vsyncpa [#allocation3], 1
    %s769 = scalar_lea.sflag [#allocation3], 1
    %770 = vsyncpa %s769, 1
    %771 = vsyncpa [#allocation6], 1
    %772 = vsyncpa [#allocation4], 1
    %s773 = scalar_lea.sflag [#allocation4], 1
    %774 = vsyncpa %s773, 1

</llo_original>
